<compile_context>
chip_gen: v6e
topology: v6e:2x2x1
jax: 0.10.0
libtpu: 0.0.40
codegen_flags: <defaults>
</compile_context>

<pallas_src>
import jax
import jax.numpy as jnp
from jax import lax
from jax.experimental import pallas as pl
from jax.experimental.pallas import tpu as pltpu


def _round_up(x, m):
    return (x + m - 1) // m * m


def _mlp_kernel(x_ref, w1_ref, b1_ref, w2_ref, b2_ref, o_ref):
    x = x_ref[...]            # [Bt, F]   (f32 or bf16)
    w1 = w1_ref[...]          # [F, 10]   (same dtype as x), pre-transposed
    b1 = b1_ref[...]          # [1, 10]   f32
    w2 = w2_ref[...]          # [1, 10]   f32
    b2 = b2_ref[0]            # scalar    f32 (SMEM)

    # Layer 1 on the MXU with f32 accumulation.
    h = jnp.dot(x, w1, preferred_element_type=jnp.float32) + b1   # [Bt, 10]
    h = jnp.maximum(h, 0.0)

    # Layer 2 (10 -> 1) also on the MXU: contract h's last dim against the w2
    # row so the result is already the lane-dense [1, Bt] output row (no
    # [Bt,1]->[1,Bt] sublane->lane relayout, no XLU lane reduction).
    row = lax.dot_general(
        w2, h,
        dimension_numbers=(((1,), (1,)), ((), ())),   # (1,H) x (Bt,H) -> (1,Bt)
        preferred_element_type=jnp.float32,
        precision=lax.Precision.HIGHEST,              # tiny K=10, cost negligible
    )
    o_ref[...] = (row + b2).astype(o_ref.dtype)


def small_linear_net_pallas(x, w1, b1, w2, b2, *, block_batch=4096,
                            cast_inputs_to_bf16=False,
                            x_vmem_budget_bytes=16 * 1024 * 1024):
    """Forward pass of small_linear_net.

    x : [B, F] float32
    w1: [10, F], b1: [10]   (PyTorch nn.Linear layout)
    w2: [1, 10], b2: [1]
    returns [B, 1] float32
    """
    B, F = x.shape
    H = w1.shape[0]           # 10
    assert w2.shape == (1, H)

    # --- operand prep (layout plumbing outside the kernel) ------------------
    # bf16 streaming only pays off if x already arrives bf16 (or the cast
    # fuses into x's producer); a standalone cast is an extra HBM pass.
    in_dtype = jnp.bfloat16 if cast_inputs_to_bf16 else x.dtype
    x_in = x.astype(in_dtype)
    w1t = w1.T.astype(in_dtype)                     # [F, H]
    b1_row = b1.reshape(1, H).astype(jnp.float32)   # [1, H]
    w2_row = w2.reshape(1, H).astype(jnp.float32)   # [1, H]
    b2_s = b2.reshape(1).astype(jnp.float32)        # scalar via SMEM

    # --- batch tiling: VMEM-budget aware, lane padding accounted ------------
    itemsize = jnp.dtype(in_dtype).itemsize
    f_lanes = _round_up(F, 128)                     # x is lane-padded in VMEM
    bt_from_vmem = max(128, x_vmem_budget_bytes // (2 * f_lanes * itemsize))
    Bt = min(block_batch, bt_from_vmem, _round_up(B, 128))
    if B > 128:
        # Guarantee >= 2 grid tiles so v7x's two TensorCores both get work.
        Bt = min(Bt, _round_up(pl.cdiv(B, 2), 128))
    Bt = max(128, (Bt // 128) * 128)                # lane-dense, unmasked stores
    num_tiles = pl.cdiv(B, Bt)                      # ragged tail masked by Pallas

    # VMEM estimate: double-buffered x + output row + resident weights.
    vmem_est = (2 * Bt * f_lanes * itemsize               # x (2 buffers)
                + 2 * 8 * Bt * 4                          # (1, Bt) f32 out row
                + 2 * _round_up(F, 32) * 128 * itemsize   # W1^T (lane-padded H)
                + 4 * 8 * 128 * 4)                        # b1, w2 rows
    vmem_limit = int(min(max(2 * vmem_est, 16 * 1024 * 1024), 48 * 1024 * 1024))

    flops = 2 * B * F * H + 4 * B * H
    bytes_accessed = (x_in.size * x_in.dtype.itemsize
                      + w1t.size * w1t.dtype.itemsize
                      + 4 * (b1_row.size + w2_row.size + b2_s.size + B))

    out = pl.pallas_call(
        _mlp_kernel,
        out_shape=jax.ShapeDtypeStruct((1, B), jnp.float32),
        grid=(num_tiles,),
        in_specs=[
            pl.BlockSpec((Bt, F), lambda i: (i, 0)),             # x: streamed
            pl.BlockSpec((F, H), lambda i: (0, 0)),              # W1^T: resident
            pl.BlockSpec((1, H), lambda i: (0, 0)),              # b1: resident
            pl.BlockSpec((1, H), lambda i: (0, 0)),              # w2 row: resident
            pl.BlockSpec(memory_space=pltpu.MemorySpace.SMEM),   # b2 scalar
        ],
        out_specs=pl.BlockSpec((1, Bt), lambda i: (0, i)),       # lane-dense row
        compiler_params=pltpu.CompilerParams(
            dimension_semantics=("parallel",),
            vmem_limit_bytes=vmem_limit,
        ),
        cost_estimate=pl.CostEstimate(
            flops=flops, transcendentals=0, bytes_accessed=bytes_accessed),
    )(x_in, w1t, b1_row, w2_row, b2_s)

    return out.reshape(B, 1)


def _init_linear(key, out_features, in_features):
    # Mimic PyTorch nn.Linear default init: U(-1/sqrt(fan_in), 1/sqrt(fan_in))
    kw, kb = jax.random.split(key)
    bound = 1.0 / jnp.sqrt(in_features)
    w = jax.random.uniform(kw, (out_features, in_features), jnp.float32, -bound, bound)
    b = jax.random.uniform(kb, (out_features,), jnp.float32, -bound, bound)
    return w, b


if __name__ == "__main__":
    key = jax.random.PRNGKey(0)
    k_x, k_l1, k_l2 = jax.random.split(key, 3)

    batch = 8
    num_features = 32

    x = jax.random.normal(k_x, (batch, num_features), jnp.float32)
    w1, b1 = _init_linear(k_l1, 10, num_features)
    w2, b2 = _init_linear(k_l2, 1, 10)

    def ref_fwd(xv, w1v):
        return jnp.maximum(xv @ w1v.T + b1, 0.0) @ w2.T + b2

    # Default (drop-in) f32 path.
    out = jax.block_until_ready(small_linear_net_pallas(x, w1, b1, w2, b2))
    assert out.shape == (batch, 1)
    assert jnp.allclose(out, ref_fwd(x, w1), atol=2e-4, rtol=2e-4)

    # Multi-tile (grid > 1) + ragged batch, no wrapper-side padding.
    big_B = 300
    xb = jax.random.normal(jax.random.PRNGKey(1), (big_B, num_features), jnp.float32)
    out_big = jax.block_until_ready(
        small_linear_net_pallas(xb, w1, b1, w2, b2, block_batch=128))
    assert out_big.shape == (big_B, 1)
    assert jnp.allclose(out_big, ref_fwd(xb, w1), atol=2e-4, rtol=2e-4)

    # Opt-in bf16 streaming path (compare against a bf16-emulated reference).
    out_bf16 = jax.block_until_ready(
        small_linear_net_pallas(x, w1, b1, w2, b2, cast_inputs_to_bf16=True))
    x_bf = x.astype(jnp.bfloat16).astype(jnp.float32)
    w1_bf = w1.astype(jnp.bfloat16).astype(jnp.float32)
    assert jnp.allclose(out_bf16, ref_fwd(x_bf, w1_bf), atol=1e-3, rtol=1e-3)

    print("KERNEL_OK")
</pallas_src>

<mosaic_0001>
module attributes {stable_mosaic.version = 11 : i64} {
  func.func @_mlp_kernel(%arg0: i32, %arg1: memref<128x32xf32, #tpu.memory_space<vmem>>, %arg2: memref<32x10xf32, #tpu.memory_space<vmem>>, %arg3: memref<1x10xf32, #tpu.memory_space<vmem>>, %arg4: memref<1x10xf32, #tpu.memory_space<vmem>>, %arg5: memref<1xf32, #tpu.memory_space<smem>>, %arg6: memref<1x128xf32, #tpu.memory_space<vmem>>) attributes {dimension_semantics = [#tpu.dimension_semantics<parallel>], iteration_bounds = array<i64: 1>, scalar_prefetch = 0 : i64, scratch_operands = 0 : i64, tpu.core_type = #tpu.core_type<tc>, window_params = [{transform_indices = @transform_0, window_bounds = array<i64: 128, 32>}, {pipeline_mode = #tpu.pipeline_mode<synchronous>, transform_indices = @transform_1, window_bounds = array<i64: 32, 10>}, {pipeline_mode = #tpu.pipeline_mode<synchronous>, transform_indices = @transform_2, window_bounds = array<i64: 1, 10>}, {pipeline_mode = #tpu.pipeline_mode<synchronous>, transform_indices = @transform_3, window_bounds = array<i64: 1, 10>}, {transform_indices = @transform_4, window_bounds = array<i64: 1>}, {transform_indices = @transform_5, window_bounds = array<i64: 1, 128>}]} {
    %c0 = arith.constant 0 : index
    %c0_0 = arith.constant 0 : index
    %0 = vector.load %arg1[%c0, %c0_0] : memref<128x32xf32, #tpu.memory_space<vmem>>, vector<128x32xf32>
    %c0_1 = arith.constant 0 : index
    %c0_2 = arith.constant 0 : index
    %1 = vector.load %arg2[%c0_1, %c0_2] : memref<32x10xf32, #tpu.memory_space<vmem>>, vector<32x10xf32>
    %c0_3 = arith.constant 0 : index
    %c0_4 = arith.constant 0 : index
    %2 = vector.load %arg3[%c0_3, %c0_4] : memref<1x10xf32, #tpu.memory_space<vmem>>, vector<1x10xf32>
    %c0_5 = arith.constant 0 : index
    %c0_6 = arith.constant 0 : index
    %3 = vector.load %arg4[%c0_5, %c0_6] : memref<1x10xf32, #tpu.memory_space<vmem>>, vector<1x10xf32>
    %c0_7 = arith.constant 0 : index
    %4 = memref.load %arg5[%c0_7] : memref<1xf32, #tpu.memory_space<smem>>
    %cst = arith.constant dense<0.000000e+00> : vector<128x10xf32>
    %5 = tpu.matmul %0, %1, %cst {dimension_numbers = #tpu.dot_dimension_numbers<[1], [0], [0], [1], [0, 0, 1, 1], [], []>} : vector<128x32xf32>, vector<32x10xf32>, vector<128x10xf32> -> vector<128x10xf32>
    %6 = vector.broadcast %2 : vector<1x10xf32> to vector<128x10xf32>
    %7 = arith.addf %5, %6 : vector<128x10xf32>
    %cst_8 = arith.constant 0.000000e+00 : f32
    %8 = vector.broadcast %cst_8 : f32 to vector<128x10xf32>
    %9 = arith.maximumf %7, %8 : vector<128x10xf32>
    %cst_9 = arith.constant dense<0.000000e+00> : vector<1x128xf32>
    %10 = tpu.matmul %3, %9, %cst_9 {dimension_numbers = #tpu.dot_dimension_numbers<[1], [1], [0], [0], [0, 0, 1, 0], [], []>, precision = #tpu.contract_precision<fp32>} : vector<1x10xf32>, vector<128x10xf32>, vector<1x128xf32> -> vector<1x128xf32>
    %11 = vector.broadcast %4 : f32 to vector<1x128xf32>
    %12 = arith.addf %10, %11 : vector<1x128xf32>
    %c0_10 = arith.constant 0 : index
    %c0_11 = arith.constant 0 : index
    %13 = vector.load %arg6[%c0_10, %c0_11] : memref<1x128xf32, #tpu.memory_space<vmem>>, vector<1x128xf32>
    tpu.vector_store %arg6[%c0_10, %c0_11], %12 {strides = array<i32>} : memref<1x128xf32, #tpu.memory_space<vmem>>, vector<1x128xf32>,
    return
  }
  func.func @transform_0(%arg0: i32) -> (i32, i32) {
    %c0_i32 = arith.constant 0 : i32
    %c0_i32_0 = arith.constant 0 : i32
    return %arg0, %c0_i32 : i32, i32
  }
  func.func @transform_1(%arg0: i32) -> (i32, i32) {
    %c0_i32 = arith.constant 0 : i32
    %c0_i32_0 = arith.constant 0 : i32
    %c0_i32_1 = arith.constant 0 : i32
    return %c0_i32, %c0_i32_0 : i32, i32
  }
  func.func @transform_2(%arg0: i32) -> (i32, i32) {
    %c0_i32 = arith.constant 0 : i32
    %c0_i32_0 = arith.constant 0 : i32
    %c0_i32_1 = arith.constant 0 : i32
    return %c0_i32, %c0_i32_0 : i32, i32
  }
  func.func @transform_3(%arg0: i32) -> (i32, i32) {
    %c0_i32 = arith.constant 0 : i32
    %c0_i32_0 = arith.constant 0 : i32
    %c0_i32_1 = arith.constant 0 : i32
    return %c0_i32, %c0_i32_0 : i32, i32
  }
  func.func @transform_4(%arg0: i32) -> i32 {
    %c0_i32 = arith.constant 0 : i32
    %c0_i32_0 = arith.constant 0 : i32
    return %c0_i32 : i32
  }
  func.func @transform_5(%arg0: i32) -> (i32, i32) {
    %c0_i32 = arith.constant 0 : i32
    %c0_i32_0 = arith.constant 0 : i32
    return %c0_i32, %arg0 : i32, i32
  }
}

</mosaic_0001>

<llo_original>
// kernel: tpu_custom_call.1
$region0: #{tpu_custom_call.1}
  #allocation0 [shape = 'u32[]', space=smem, size = 0x4, offset = 0x4, fixed_abs, tag = 'smem constant byte address 0x4 - core index']
  #allocation1 [shape = 'u32[144,128]{1,0:T(1,128)}', space=vmem, size = 0x12000, scoped, tag = 'internal scratch']
  #allocation2 [shape = 'f32[1]{0:T(128)S(6)}', space=smem, size = 0x200, scoped, tag = 'scoped memory for tpu_custom_call.1']
  %s0 = inlined_call_operand.vmem [shape: f32[8,32], index: 0, kind: input, shape index: {}]
  %s1 = inlined_call_operand.vmem [shape: f32[32,10], index: 1, kind: input, shape index: {}]
  %s2 = inlined_call_operand.vmem [shape: f32[1,10], index: 2, kind: input, shape index: {}]
  %s3 = inlined_call_operand.vmem [shape: f32[1,10], index: 3, kind: input, shape index: {}]
  %s4 = inlined_call_operand.<no memory space> [shape: f32[1], index: 4, kind: input, shape index: {}]
  %s5 = inlined_call_operand.hbm [shape: f32[1,8], index: 5, kind: output, shape index: {}]
  %s6 = sld [smem:[#allocation0]]
  $region30: #{tpu_custom_call.1} parent=0
    _
  %s8 = ssub.s32 1, %s6
  %s9 = scalar_select 0, %s8, %s6
  %10 = sst [smem:[#allocation2]] %s4
  $region1: #{tpu_custom_call.1} parent=0
    #allocation3 [shape = 'u8[512]{0}', space=vmem, size = 0x400, scoped, tag = 'output window, operand 0, single buffered']
    #allocation4 [shape = 's32[1]{0}', space=sflag, size = 0x4, scoped, tag = 'scoped memory for tpu_custom_call.1']
    %11 = vsyncpa [#allocation4], 0
    // Predicated region
    $region2: #{tpu_custom_call.1} parent=1 // pred_check
      _
    $region3: #{tpu_custom_call.1} parent=1 // pred_check_branch
      %13 = sbr.rel (0) target = $region5
    $region4: #{tpu_custom_call.1} parent=1 // pred_region
      _
    $region5: #{tpu_custom_call.1} parent=1 // pred_fallthru
      _
    // Predicated region
    $region6: #{tpu_custom_call.1} parent=1 // pred_check
      _
    $region7: #{tpu_custom_call.1} parent=1 // pred_check_branch
      %15 = sbr.rel (0) target = $region9
    $region8: #{tpu_custom_call.1} parent=1 // pred_region
      _
    $region9: #{tpu_custom_call.1} parent=1 // pred_fallthru
      _
    // Predicated region
    $region10: #{tpu_custom_call.1} parent=1 // pred_check
      _
    $region11: #{tpu_custom_call.1} parent=1 // pred_check_branch
      %17 = sbr.rel (0) target = $region13
    $region12: #{tpu_custom_call.1} parent=1 // pred_region
      _
    $region13: #{tpu_custom_call.1} parent=1 // pred_fallthru
      _
    // Predicated region
    $region14: #{tpu_custom_call.1} parent=1 // pred_check
      _
    $region15: #{tpu_custom_call.1} parent=1 // pred_check_branch
      %19 = sbr.rel (0) target = $region17
    $region16: #{tpu_custom_call.1} parent=1 // pred_region
      _
    $region17: #{tpu_custom_call.1} parent=1 // pred_fallthru
      _
    // Predicated region
    $region18: #{tpu_custom_call.1} parent=1 // pred_check
      _
    $region19: #{tpu_custom_call.1} parent=1 // pred_check_branch
      %21 = sbr.rel (0) target = $region21
    $region20: #{tpu_custom_call.1} parent=1 // pred_region
      _
    $region21: #{tpu_custom_call.1} parent=1 // pred_fallthru
      _
    %v22 = vld [vmem:[%s0] sm:$0xff]
    %v23 = vld [vmem:[%s0 + $0x8] sm:$0xff]
    %v24 = vld [vmem:[%s0 + $0x10] sm:$0xff]
    %v25 = vld [vmem:[%s0 + $0x18] sm:$0xff]
    %v26 = vld [vmem:[%s0 + $0x20] sm:$0xff]
    %v27 = vld [vmem:[%s0 + $0x28] sm:$0xff]
    %v28 = vld [vmem:[%s0 + $0x30] sm:$0xff]
    %v29 = vld [vmem:[%s0 + $0x38] sm:$0xff]
    %v30 = vld [vmem:[%s0 + $0x40] sm:$0xff]
    %v31 = vld [vmem:[%s0 + $0x48] sm:$0xff]
    %v32 = vld [vmem:[%s0 + $0x50] sm:$0xff]
    %v33 = vld [vmem:[%s0 + $0x58] sm:$0xff]
    %v34 = vld [vmem:[%s0 + $0x60] sm:$0xff]
    %v35 = vld [vmem:[%s0 + $0x68] sm:$0xff]
    %v36 = vld [vmem:[%s0 + $0x70] sm:$0xff]
    %v37 = vld [vmem:[%s0 + $0x78] sm:$0xff]
    %v38 = vld [vmem:[%s1] sm:$0xff]
    %v39 = vld [vmem:[%s1 + $0x8] sm:$0xff]
    %v40 = vld [vmem:[%s1 + $0x10] sm:$0xff]
    %v41 = vld [vmem:[%s1 + $0x18] sm:$0xff]
    %v42 = vld [vmem:[%s2] sm:$0x1]
    %v43 = vld [vmem:[%s3] sm:$0x1]
    %s44 = sld [smem:[#allocation2]]
    %v46 = vlaneseq
    %v47 = vshrl.u32 %v46, 7
    %v48 = vsub.s32 0, %v47
    %v49 = vrot.slane %v42, %v48
    %vm51 = vcmask 261120
    %v53 = vsel %vm51, %v22, 0
    %v56 = vsel %vm51, %v23, 0
    %v59 = vsel %vm51, %v24, 0
    %v62 = vsel %vm51, %v25, 0
    %v65 = vsel %vm51, %v26, 0
    %v68 = vsel %vm51, %v27, 0
    %v71 = vsel %vm51, %v28, 0
    %v74 = vsel %vm51, %v29, 0
    %v77 = vsel %vm51, %v30, 0
    %v80 = vsel %vm51, %v31, 0
    %v83 = vsel %vm51, %v32, 0
    %v86 = vsel %vm51, %v33, 0
    %v89 = vsel %vm51, %v34, 0
    %v92 = vsel %vm51, %v35, 0
    %v95 = vsel %vm51, %v36, 0
    %v98 = vsel %vm51, %v37, 0
    %100 = vmatprep.subr.mxu0 0.0
    %101 = vmatpush1.msra.mxu0 0.0
    %102 = vmatprep.subr.mxu0 0.0
    %103 = vmatpush1.msra.mxu0 0.0
    %104 = vmatprep.subr.mxu0 0.0
    %105 = vmatpush1.msra.mxu0 0.0
    %106 = vmatprep.subr.mxu0 0.0
    %107 = vmatpush1.msra.mxu0 0.0
    %108 = vmatprep.subr.mxu0 0.0
    %109 = vmatpush1.msra.mxu0 0.0
    %110 = vmatprep.subr.mxu0 0.0
    %111 = vmatpush1.msra.mxu0 0.0
    %112 = vmatprep.subr.mxu0 0.0
    %113 = vmatpush1.msra.mxu0 0.0
    %114 = vmatprep.subr.mxu0 0.0
    %115 = vmatpush1.msra.mxu0 0.0
    %116 = vmatprep.subr.mxu0 0.0
    %117 = vmatpush1.msra.mxu0 0.0
    %118 = vmatprep.subr.mxu0 0.0
    %119 = vmatpush1.msra.mxu0 0.0
    %120 = vmatprep.subr.mxu0 0.0
    %121 = vmatpush1.msra.mxu0 0.0
    %122 = vmatprep.subr.mxu0 0.0
    %123 = vmatpush1.msra.mxu0 0.0
    %124 = vmatprep.subr.mxu0 0.0
    %125 = vmatpush1.msra.mxu0 %v41
    %126 = vmatprep.subr.mxu0 0.0
    %127 = vmatpush1.msra.mxu0 %v40
    %128 = vmatprep.subr.mxu0 0.0
    %129 = vmatpush1.msra.mxu0 %v39
    %130 = vmatprep.subr.mxu0 0.0
    %131 = vmatpush1.msra.mxu0 %v38
    %132 = vmatprep.subr.mxu0 0.0
    %133 = vmatpush2.msra.mxu0 0.0
    %134 = vmatprep.subr.mxu0 0.0
    %135 = vmatpush2.msra.mxu0 0.0
    %136 = vmatprep.subr.mxu0 0.0
    %137 = vmatpush2.msra.mxu0 0.0
    %138 = vmatprep.subr.mxu0 0.0
    %139 = vmatpush2.msra.mxu0 0.0
    %140 = vmatprep.subr.mxu0 0.0
    %141 = vmatpush2.msra.mxu0 0.0
    %142 = vmatprep.subr.mxu0 0.0
    %143 = vmatpush2.msra.mxu0 0.0
    %144 = vmatprep.subr.mxu0 0.0
    %145 = vmatpush2.msra.mxu0 0.0
    %146 = vmatprep.subr.mxu0 0.0
    %147 = vmatpush2.msra.mxu0 0.0
    %148 = vmatprep.subr.mxu0 0.0
    %149 = vmatpush2.msra.mxu0 0.0
    %150 = vmatprep.subr.mxu0 0.0
    %151 = vmatpush2.msra.mxu0 0.0
    %152 = vmatprep.subr.mxu0 0.0
    %153 = vmatpush2.msra.mxu0 0.0
    %154 = vmatprep.subr.mxu0 0.0
    %155 = vmatpush2.msra.mxu0 0.0
    %156 = vmatprep.subr.mxu0 0.0
    %157 = vmatpush2.msra.mxu0 0.0
    %158 = vmatprep.subr.mxu0 0.0
    %159 = vmatpush2.msra.mxu0 0.0
    %160 = vmatprep.subr.mxu0 0.0
    %161 = vmatpush2.msra.mxu0 0.0
    %162 = vmatprep.subr.mxu0 0.0
    %163 = vmatpush2.msra.mxu0 0.0
    %164 = vmatprep.mubr.f32.mxu0 0.0
    %165 = vmatmul.mubr.f32.gmra.mxu0 %v53
    %v166 = vpop.f32.mrf.mxu0
    %v167 = vadd.f32 %v49, %v166
    %v168 = vpop.f32.mrf.mxu0
    %169 = vmatprep.mubr.f32.mxu0 0.0
    %170 = vmatmul.mubr.f32.gmra.mxu0 %v56
    %v171 = vpop.f32.mrf.mxu0
    %v172 = vadd.f32 %v49, %v171
    %v173 = vpop.f32.mrf.mxu0
    %174 = vmatprep.mubr.f32.mxu0 0.0
    %175 = vmatmul.mubr.f32.gmra.mxu0 %v59
    %v176 = vpop.f32.mrf.mxu0
    %v177 = vadd.f32 %v49, %v176
    %v178 = vpop.f32.mrf.mxu0
    %179 = vmatprep.mubr.f32.mxu0 0.0
    %180 = vmatmul.mubr.f32.gmra.mxu0 %v62
    %v181 = vpop.f32.mrf.mxu0
    %v182 = vadd.f32 %v49, %v181
    %v183 = vpop.f32.mrf.mxu0
    %184 = vmatprep.mubr.f32.mxu0 0.0
    %185 = vmatmul.mubr.f32.gmra.mxu0 %v65
    %v186 = vpop.f32.mrf.mxu0
    %v187 = vadd.f32 %v49, %v186
    %v188 = vpop.f32.mrf.mxu0
    %189 = vmatprep.mubr.f32.mxu0 0.0
    %190 = vmatmul.mubr.f32.gmra.mxu0 %v68
    %v191 = vpop.f32.mrf.mxu0
    %v192 = vadd.f32 %v49, %v191
    %v193 = vpop.f32.mrf.mxu0
    %194 = vmatprep.mubr.f32.mxu0 0.0
    %195 = vmatmul.mubr.f32.gmra.mxu0 %v71
    %v196 = vpop.f32.mrf.mxu0
    %v197 = vadd.f32 %v49, %v196
    %v198 = vpop.f32.mrf.mxu0
    %199 = vmatprep.mubr.f32.mxu0 0.0
    %200 = vmatmul.mubr.f32.gmra.mxu0 %v74
    %v201 = vpop.f32.mrf.mxu0
    %v202 = vadd.f32 %v49, %v201
    %v203 = vpop.f32.mrf.mxu0
    %204 = vmatprep.mubr.f32.mxu0 0.0
    %205 = vmatmul.mubr.f32.gmra.mxu0 %v77
    %v206 = vpop.f32.mrf.mxu0
    %v207 = vadd.f32 %v49, %v206
    %v208 = vpop.f32.mrf.mxu0
    %209 = vmatprep.mubr.f32.mxu0 0.0
    %210 = vmatmul.mubr.f32.gmra.mxu0 %v80
    %v211 = vpop.f32.mrf.mxu0
    %v212 = vadd.f32 %v49, %v211
    %v213 = vpop.f32.mrf.mxu0
    %214 = vmatprep.mubr.f32.mxu0 0.0
    %215 = vmatmul.mubr.f32.gmra.mxu0 %v83
    %v216 = vpop.f32.mrf.mxu0
    %v217 = vadd.f32 %v49, %v216
    %v218 = vpop.f32.mrf.mxu0
    %219 = vmatprep.mubr.f32.mxu0 0.0
    %220 = vmatmul.mubr.f32.gmra.mxu0 %v86
    %v221 = vpop.f32.mrf.mxu0
    %v222 = vadd.f32 %v49, %v221
    %v223 = vpop.f32.mrf.mxu0
    %224 = vmatprep.mubr.f32.mxu0 0.0
    %225 = vmatmul.mubr.f32.gmra.mxu0 %v89
    %v226 = vpop.f32.mrf.mxu0
    %v227 = vadd.f32 %v49, %v226
    %v228 = vpop.f32.mrf.mxu0
    %229 = vmatprep.mubr.f32.mxu0 0.0
    %230 = vmatmul.mubr.f32.gmra.mxu0 %v92
    %v231 = vpop.f32.mrf.mxu0
    %v232 = vadd.f32 %v49, %v231
    %v233 = vpop.f32.mrf.mxu0
    %234 = vmatprep.mubr.f32.mxu0 0.0
    %235 = vmatmul.mubr.f32.gmra.mxu0 %v95
    %v236 = vpop.f32.mrf.mxu0
    %v237 = vadd.f32 %v49, %v236
    %v238 = vpop.f32.mrf.mxu0
    %239 = vmatprep.mubr.f32.mxu0 0.0
    %240 = vmatmul.mubr.f32.gmra.mxu0 %v98
    %v241 = vpop.f32.mrf.mxu0
    %v242 = vadd.f32 %v49, %v241
    %v243 = vpop.f32.mrf.mxu0
    %244 = vdwg.mxu0
    %v245 = vmax.f32 %v167, 0.0
    %v246 = vmax.f32 %v172, 0.0
    %v247 = vmax.f32 %v177, 0.0
    %v248 = vmax.f32 %v182, 0.0
    %v249 = vmax.f32 %v187, 0.0
    %v250 = vmax.f32 %v192, 0.0
    %v251 = vmax.f32 %v197, 0.0
    %v252 = vmax.f32 %v202, 0.0
    %v253 = vmax.f32 %v207, 0.0
    %v254 = vmax.f32 %v212, 0.0
    %v255 = vmax.f32 %v217, 0.0
    %v256 = vmax.f32 %v222, 0.0
    %v257 = vmax.f32 %v227, 0.0
    %v258 = vmax.f32 %v232, 0.0
    %v259 = vmax.f32 %v237, 0.0
    %v260 = vmax.f32 %v242, 0.0
    %v261 = vstv %s44
    %vm262 = vcmask 80896
    %v264 = vsel %vm262, %v43, 0
    %v267 = vsel %vm262, %v245, 0
    %v270 = vsel %vm262, %v246, 0
    %v273 = vsel %vm262, %v247, 0
    %v276 = vsel %vm262, %v248, 0
    %v279 = vsel %vm262, %v249, 0
    %v282 = vsel %vm262, %v250, 0
    %v285 = vsel %vm262, %v251, 0
    %v288 = vsel %vm262, %v252, 0
    %v291 = vsel %vm262, %v253, 0
    %v294 = vsel %vm262, %v254, 0
    %v297 = vsel %vm262, %v255, 0
    %v300 = vsel %vm262, %v256, 0
    %v303 = vsel %vm262, %v257, 0
    %v306 = vsel %vm262, %v258, 0
    %v309 = vsel %vm262, %v259, 0
    %v312 = vsel %vm262, %v260, 0
    %314 = vmatprep.subr.mxu0 0.0
    %v315 = vand.u32 %v312, 4294901760
    %316 = vmatpush1.xpose.msra.mxu0 %v315
    %317 = vmatprep.subr.mxu0 0.0
    %v318 = vand.u32 %v309, 4294901760
    %319 = vmatpush1.xpose.msra.mxu0 %v318
    %320 = vmatprep.subr.mxu0 0.0
    %v321 = vand.u32 %v306, 4294901760
    %322 = vmatpush1.xpose.msra.mxu0 %v321
    %323 = vmatprep.subr.mxu0 0.0
    %v324 = vand.u32 %v303, 4294901760
    %325 = vmatpush1.xpose.msra.mxu0 %v324
    %326 = vmatprep.subr.mxu0 0.0
    %v327 = vand.u32 %v300, 4294901760
    %328 = vmatpush1.xpose.msra.mxu0 %v327
    %329 = vmatprep.subr.mxu0 0.0
    %v330 = vand.u32 %v297, 4294901760
    %331 = vmatpush1.xpose.msra.mxu0 %v330
    %332 = vmatprep.subr.mxu0 0.0
    %v333 = vand.u32 %v294, 4294901760
    %334 = vmatpush1.xpose.msra.mxu0 %v333
    %335 = vmatprep.subr.mxu0 0.0
    %v336 = vand.u32 %v291, 4294901760
    %337 = vmatpush1.xpose.msra.mxu0 %v336
    %338 = vmatprep.subr.mxu0 0.0
    %v339 = vand.u32 %v288, 4294901760
    %340 = vmatpush1.xpose.msra.mxu0 %v339
    %341 = vmatprep.subr.mxu0 0.0
    %v342 = vand.u32 %v285, 4294901760
    %343 = vmatpush1.xpose.msra.mxu0 %v342
    %344 = vmatprep.subr.mxu0 0.0
    %v345 = vand.u32 %v282, 4294901760
    %346 = vmatpush1.xpose.msra.mxu0 %v345
    %347 = vmatprep.subr.mxu0 0.0
    %v348 = vand.u32 %v279, 4294901760
    %349 = vmatpush1.xpose.msra.mxu0 %v348
    %350 = vmatprep.subr.mxu0 0.0
    %v351 = vand.u32 %v276, 4294901760
    %352 = vmatpush1.xpose.msra.mxu0 %v351
    %353 = vmatprep.subr.mxu0 0.0
    %v354 = vand.u32 %v273, 4294901760
    %355 = vmatpush1.xpose.msra.mxu0 %v354
    %356 = vmatprep.subr.mxu0 0.0
    %v357 = vand.u32 %v270, 4294901760
    %358 = vmatpush1.xpose.msra.mxu0 %v357
    %359 = vmatprep.subr.mxu0 0.0
    %v360 = vand.u32 %v267, 4294901760
    %361 = vmatpush1.xpose.msra.mxu0 %v360
    %362 = vmatprep.subr.mxu0 0.0
    %363 = vmatpush2.xpose.msra.mxu0 0.0
    %364 = vmatprep.subr.mxu0 0.0
    %365 = vmatpush2.xpose.msra.mxu0 0.0
    %366 = vmatprep.subr.mxu0 0.0
    %367 = vmatpush2.xpose.msra.mxu0 0.0
    %368 = vmatprep.subr.mxu0 0.0
    %369 = vmatpush2.xpose.msra.mxu0 0.0
    %370 = vmatprep.subr.mxu0 0.0
    %371 = vmatpush2.xpose.msra.mxu0 0.0
    %372 = vmatprep.subr.mxu0 0.0
    %373 = vmatpush2.xpose.msra.mxu0 0.0
    %374 = vmatprep.subr.mxu0 0.0
    %375 = vmatpush2.xpose.msra.mxu0 0.0
    %376 = vmatprep.subr.mxu0 0.0
    %377 = vmatpush2.xpose.msra.mxu0 0.0
    %378 = vmatprep.subr.mxu0 0.0
    %379 = vmatpush2.xpose.msra.mxu0 0.0
    %380 = vmatprep.subr.mxu0 0.0
    %381 = vmatpush2.xpose.msra.mxu0 0.0
    %382 = vmatprep.subr.mxu0 0.0
    %383 = vmatpush2.xpose.msra.mxu0 0.0
    %384 = vmatprep.subr.mxu0 0.0
    %385 = vmatpush2.xpose.msra.mxu0 0.0
    %386 = vmatprep.subr.mxu0 0.0
    %387 = vmatpush2.xpose.msra.mxu0 0.0
    %388 = vmatprep.subr.mxu0 0.0
    %389 = vmatpush2.xpose.msra.mxu0 0.0
    %390 = vmatprep.subr.mxu0 0.0
    %391 = vmatpush2.xpose.msra.mxu0 0.0
    %392 = vmatprep.subr.mxu0 0.0
    %393 = vmatpush2.xpose.msra.mxu0 0.0
    %394 = vmatprep.mubr.f32.mxu0 0.0
    %v395 = vand.u32 %v264, 4294901760
    %v396 = vsub.f32 %v264, %v395
    %v397 = vand.u32 %v396, 4294901760
    %v398 = vsub.f32 %v396, %v397
    %v399 = vand.u32 %v398, 4294901760
    %400 = vmatmul.mubr.f32.gmra.mxu0 %v399
    %v401 = vpop.f32.mrf.mxu0
    %v402 = vadd.f32 %v261, %v401
    %v403 = vpop.f32.mrf.mxu0
    %404 = vdwg.mxu0
    %405 = vmatprep.subr.mxu0 0.0
    %v406 = vand.u32 %v312, 4294901760
    %v407 = vsub.f32 %v312, %v406
    %v408 = vand.u32 %v407, 4294901760
    %v409 = vsub.f32 %v407, %v408
    %v410 = vand.u32 %v409, 4294901760
    %411 = vmatpush1.xpose.msra.mxu0 %v410
    %412 = vmatprep.subr.mxu0 0.0
    %v413 = vand.u32 %v309, 4294901760
    %v414 = vsub.f32 %v309, %v413
    %v415 = vand.u32 %v414, 4294901760
    %v416 = vsub.f32 %v414, %v415
    %v417 = vand.u32 %v416, 4294901760
    %418 = vmatpush1.xpose.msra.mxu0 %v417
    %419 = vmatprep.subr.mxu0 0.0
    %v420 = vand.u32 %v306, 4294901760
    %v421 = vsub.f32 %v306, %v420
    %v422 = vand.u32 %v421, 4294901760
    %v423 = vsub.f32 %v421, %v422
    %v424 = vand.u32 %v423, 4294901760
    %425 = vmatpush1.xpose.msra.mxu0 %v424
    %426 = vmatprep.subr.mxu0 0.0
    %v427 = vand.u32 %v303, 4294901760
    %v428 = vsub.f32 %v303, %v427
    %v429 = vand.u32 %v428, 4294901760
    %v430 = vsub.f32 %v428, %v429
    %v431 = vand.u32 %v430, 4294901760
    %432 = vmatpush1.xpose.msra.mxu0 %v431
    %433 = vmatprep.subr.mxu0 0.0
    %v434 = vand.u32 %v300, 4294901760
    %v435 = vsub.f32 %v300, %v434
    %v436 = vand.u32 %v435, 4294901760
    %v437 = vsub.f32 %v435, %v436
    %v438 = vand.u32 %v437, 4294901760
    %439 = vmatpush1.xpose.msra.mxu0 %v438
    %440 = vmatprep.subr.mxu0 0.0
    %v441 = vand.u32 %v297, 4294901760
    %v442 = vsub.f32 %v297, %v441
    %v443 = vand.u32 %v442, 4294901760
    %v444 = vsub.f32 %v442, %v443
    %v445 = vand.u32 %v444, 4294901760
    %446 = vmatpush1.xpose.msra.mxu0 %v445
    %447 = vmatprep.subr.mxu0 0.0
    %v448 = vand.u32 %v294, 4294901760
    %v449 = vsub.f32 %v294, %v448
    %v450 = vand.u32 %v449, 4294901760
    %v451 = vsub.f32 %v449, %v450
    %v452 = vand.u32 %v451, 4294901760
    %453 = vmatpush1.xpose.msra.mxu0 %v452
    %454 = vmatprep.subr.mxu0 0.0
    %v455 = vand.u32 %v291, 4294901760
    %v456 = vsub.f32 %v291, %v455
    %v457 = vand.u32 %v456, 4294901760
    %v458 = vsub.f32 %v456, %v457
    %v459 = vand.u32 %v458, 4294901760
    %460 = vmatpush1.xpose.msra.mxu0 %v459
    %461 = vmatprep.subr.mxu0 0.0
    %v462 = vand.u32 %v288, 4294901760
    %v463 = vsub.f32 %v288, %v462
    %v464 = vand.u32 %v463, 4294901760
    %v465 = vsub.f32 %v463, %v464
    %v466 = vand.u32 %v465, 4294901760
    %467 = vmatpush1.xpose.msra.mxu0 %v466
    %468 = vmatprep.subr.mxu0 0.0
    %v469 = vand.u32 %v285, 4294901760
    %v470 = vsub.f32 %v285, %v469
    %v471 = vand.u32 %v470, 4294901760
    %v472 = vsub.f32 %v470, %v471
    %v473 = vand.u32 %v472, 4294901760
    %474 = vmatpush1.xpose.msra.mxu0 %v473
    %475 = vmatprep.subr.mxu0 0.0
    %v476 = vand.u32 %v282, 4294901760
    %v477 = vsub.f32 %v282, %v476
    %v478 = vand.u32 %v477, 4294901760
    %v479 = vsub.f32 %v477, %v478
    %v480 = vand.u32 %v479, 4294901760
    %481 = vmatpush1.xpose.msra.mxu0 %v480
    %482 = vmatprep.subr.mxu0 0.0
    %v483 = vand.u32 %v279, 4294901760
    %v484 = vsub.f32 %v279, %v483
    %v485 = vand.u32 %v484, 4294901760
    %v486 = vsub.f32 %v484, %v485
    %v487 = vand.u32 %v486, 4294901760
    %488 = vmatpush1.xpose.msra.mxu0 %v487
    %489 = vmatprep.subr.mxu0 0.0
    %v490 = vand.u32 %v276, 4294901760
    %v491 = vsub.f32 %v276, %v490
    %v492 = vand.u32 %v491, 4294901760
    %v493 = vsub.f32 %v491, %v492
    %v494 = vand.u32 %v493, 4294901760
    %495 = vmatpush1.xpose.msra.mxu0 %v494
    %496 = vmatprep.subr.mxu0 0.0
    %v497 = vand.u32 %v273, 4294901760
    %v498 = vsub.f32 %v273, %v497
    %v499 = vand.u32 %v498, 4294901760
    %v500 = vsub.f32 %v498, %v499
    %v501 = vand.u32 %v500, 4294901760
    %502 = vmatpush1.xpose.msra.mxu0 %v501
    %503 = vmatprep.subr.mxu0 0.0
    %v504 = vand.u32 %v270, 4294901760
    %v505 = vsub.f32 %v270, %v504
    %v506 = vand.u32 %v505, 4294901760
    %v507 = vsub.f32 %v505, %v506
    %v508 = vand.u32 %v507, 4294901760
    %509 = vmatpush1.xpose.msra.mxu0 %v508
    %510 = vmatprep.subr.mxu0 0.0
    %v511 = vand.u32 %v267, 4294901760
    %v512 = vsub.f32 %v267, %v511
    %v513 = vand.u32 %v512, 4294901760
    %v514 = vsub.f32 %v512, %v513
    %v515 = vand.u32 %v514, 4294901760
    %516 = vmatpush1.xpose.msra.mxu0 %v515
    %517 = vmatprep.subr.mxu0 0.0
    %518 = vmatpush2.xpose.msra.mxu0 0.0
    %519 = vmatprep.subr.mxu0 0.0
    %520 = vmatpush2.xpose.msra.mxu0 0.0
    %521 = vmatprep.subr.mxu0 0.0
    %522 = vmatpush2.xpose.msra.mxu0 0.0
    %523 = vmatprep.subr.mxu0 0.0
    %524 = vmatpush2.xpose.msra.mxu0 0.0
    %525 = vmatprep.subr.mxu0 0.0
    %526 = vmatpush2.xpose.msra.mxu0 0.0
    %527 = vmatprep.subr.mxu0 0.0
    %528 = vmatpush2.xpose.msra.mxu0 0.0
    %529 = vmatprep.subr.mxu0 0.0
    %530 = vmatpush2.xpose.msra.mxu0 0.0
    %531 = vmatprep.subr.mxu0 0.0
    %532 = vmatpush2.xpose.msra.mxu0 0.0
    %533 = vmatprep.subr.mxu0 0.0
    %534 = vmatpush2.xpose.msra.mxu0 0.0
    %535 = vmatprep.subr.mxu0 0.0
    %536 = vmatpush2.xpose.msra.mxu0 0.0
    %537 = vmatprep.subr.mxu0 0.0
    %538 = vmatpush2.xpose.msra.mxu0 0.0
    %539 = vmatprep.subr.mxu0 0.0
    %540 = vmatpush2.xpose.msra.mxu0 0.0
    %541 = vmatprep.subr.mxu0 0.0
    %542 = vmatpush2.xpose.msra.mxu0 0.0
    %543 = vmatprep.subr.mxu0 0.0
    %544 = vmatpush2.xpose.msra.mxu0 0.0
    %545 = vmatprep.subr.mxu0 0.0
    %546 = vmatpush2.xpose.msra.mxu0 0.0
    %547 = vmatprep.subr.mxu0 0.0
    %548 = vmatpush2.xpose.msra.mxu0 0.0
    %549 = vmatprep.mubr.f32.mxu0 0.0
    %v550 = vand.u32 %v264, 4294901760
    %551 = vmatmul.mubr.f32.gmra.mxu0 %v550
    %v552 = vpop.f32.mrf.mxu0
    %v553 = vadd.f32 %v402, %v552
    %v554 = vpop.f32.mrf.mxu0
    %555 = vdwg.mxu0
    %556 = vmatprep.subr.mxu0 0.0
    %v557 = vand.u32 %v312, 4294901760
    %v558 = vsub.f32 %v312, %v557
    %559 = vmatpush1.xpose.msra.mxu0 %v558
    %560 = vmatprep.subr.mxu0 0.0
    %v561 = vand.u32 %v309, 4294901760
    %v562 = vsub.f32 %v309, %v561
    %563 = vmatpush1.xpose.msra.mxu0 %v562
    %564 = vmatprep.subr.mxu0 0.0
    %v565 = vand.u32 %v306, 4294901760
    %v566 = vsub.f32 %v306, %v565
    %567 = vmatpush1.xpose.msra.mxu0 %v566
    %568 = vmatprep.subr.mxu0 0.0
    %v569 = vand.u32 %v303, 4294901760
    %v570 = vsub.f32 %v303, %v569
    %571 = vmatpush1.xpose.msra.mxu0 %v570
    %572 = vmatprep.subr.mxu0 0.0
    %v573 = vand.u32 %v300, 4294901760
    %v574 = vsub.f32 %v300, %v573
    %575 = vmatpush1.xpose.msra.mxu0 %v574
    %576 = vmatprep.subr.mxu0 0.0
    %v577 = vand.u32 %v297, 4294901760
    %v578 = vsub.f32 %v297, %v577
    %579 = vmatpush1.xpose.msra.mxu0 %v578
    %580 = vmatprep.subr.mxu0 0.0
    %v581 = vand.u32 %v294, 4294901760
    %v582 = vsub.f32 %v294, %v581
    %583 = vmatpush1.xpose.msra.mxu0 %v582
    %584 = vmatprep.subr.mxu0 0.0
    %v585 = vand.u32 %v291, 4294901760
    %v586 = vsub.f32 %v291, %v585
    %587 = vmatpush1.xpose.msra.mxu0 %v586
    %588 = vmatprep.subr.mxu0 0.0
    %v589 = vand.u32 %v288, 4294901760
    %v590 = vsub.f32 %v288, %v589
    %591 = vmatpush1.xpose.msra.mxu0 %v590
    %592 = vmatprep.subr.mxu0 0.0
    %v593 = vand.u32 %v285, 4294901760
    %v594 = vsub.f32 %v285, %v593
    %595 = vmatpush1.xpose.msra.mxu0 %v594
    %596 = vmatprep.subr.mxu0 0.0
    %v597 = vand.u32 %v282, 4294901760
    %v598 = vsub.f32 %v282, %v597
    %599 = vmatpush1.xpose.msra.mxu0 %v598
    %600 = vmatprep.subr.mxu0 0.0
    %v601 = vand.u32 %v279, 4294901760
    %v602 = vsub.f32 %v279, %v601
    %603 = vmatpush1.xpose.msra.mxu0 %v602
    %604 = vmatprep.subr.mxu0 0.0
    %v605 = vand.u32 %v276, 4294901760
    %v606 = vsub.f32 %v276, %v605
    %607 = vmatpush1.xpose.msra.mxu0 %v606
    %608 = vmatprep.subr.mxu0 0.0
    %v609 = vand.u32 %v273, 4294901760
    %v610 = vsub.f32 %v273, %v609
    %611 = vmatpush1.xpose.msra.mxu0 %v610
    %612 = vmatprep.subr.mxu0 0.0
    %v613 = vand.u32 %v270, 4294901760
    %v614 = vsub.f32 %v270, %v613
    %615 = vmatpush1.xpose.msra.mxu0 %v614
    %616 = vmatprep.subr.mxu0 0.0
    %v617 = vand.u32 %v267, 4294901760
    %v618 = vsub.f32 %v267, %v617
    %619 = vmatpush1.xpose.msra.mxu0 %v618
    %620 = vmatprep.subr.mxu0 0.0
    %621 = vmatpush2.xpose.msra.mxu0 0.0
    %622 = vmatprep.subr.mxu0 0.0
    %623 = vmatpush2.xpose.msra.mxu0 0.0
    %624 = vmatprep.subr.mxu0 0.0
    %625 = vmatpush2.xpose.msra.mxu0 0.0
    %626 = vmatprep.subr.mxu0 0.0
    %627 = vmatpush2.xpose.msra.mxu0 0.0
    %628 = vmatprep.subr.mxu0 0.0
    %629 = vmatpush2.xpose.msra.mxu0 0.0
    %630 = vmatprep.subr.mxu0 0.0
    %631 = vmatpush2.xpose.msra.mxu0 0.0
    %632 = vmatprep.subr.mxu0 0.0
    %633 = vmatpush2.xpose.msra.mxu0 0.0
    %634 = vmatprep.subr.mxu0 0.0
    %635 = vmatpush2.xpose.msra.mxu0 0.0
    %636 = vmatprep.subr.mxu0 0.0
    %637 = vmatpush2.xpose.msra.mxu0 0.0
    %638 = vmatprep.subr.mxu0 0.0
    %639 = vmatpush2.xpose.msra.mxu0 0.0
    %640 = vmatprep.subr.mxu0 0.0
    %641 = vmatpush2.xpose.msra.mxu0 0.0
    %642 = vmatprep.subr.mxu0 0.0
    %643 = vmatpush2.xpose.msra.mxu0 0.0
    %644 = vmatprep.subr.mxu0 0.0
    %645 = vmatpush2.xpose.msra.mxu0 0.0
    %646 = vmatprep.subr.mxu0 0.0
    %647 = vmatpush2.xpose.msra.mxu0 0.0
    %648 = vmatprep.subr.mxu0 0.0
    %649 = vmatpush2.xpose.msra.mxu0 0.0
    %650 = vmatprep.subr.mxu0 0.0
    %651 = vmatpush2.xpose.msra.mxu0 0.0
    %652 = vmatprep.mubr.f32.mxu0 0.0
    %v653 = vand.u32 %v264, 4294901760
    %v654 = vsub.f32 %v264, %v653
    %655 = vmatmul.mubr.f32.gmra.mxu0 %v654
    %v656 = vpop.f32.mrf.mxu0
    %v657 = vadd.f32 %v553, %v656
    %v658 = vpop.f32.mrf.mxu0
    %659 = vdwg.mxu0
    %660 = vmatprep.subr.mxu0 0.0
    %v661 = vand.u32 %v312, 4294901760
    %662 = vmatpush1.xpose.msra.mxu0 %v661
    %663 = vmatprep.subr.mxu0 0.0
    %v664 = vand.u32 %v309, 4294901760
    %665 = vmatpush1.xpose.msra.mxu0 %v664
    %666 = vmatprep.subr.mxu0 0.0
    %v667 = vand.u32 %v306, 4294901760
    %668 = vmatpush1.xpose.msra.mxu0 %v667
    %669 = vmatprep.subr.mxu0 0.0
    %v670 = vand.u32 %v303, 4294901760
    %671 = vmatpush1.xpose.msra.mxu0 %v670
    %672 = vmatprep.subr.mxu0 0.0
    %v673 = vand.u32 %v300, 4294901760
    %674 = vmatpush1.xpose.msra.mxu0 %v673
    %675 = vmatprep.subr.mxu0 0.0
    %v676 = vand.u32 %v297, 4294901760
    %677 = vmatpush1.xpose.msra.mxu0 %v676
    %678 = vmatprep.subr.mxu0 0.0
    %v679 = vand.u32 %v294, 4294901760
    %680 = vmatpush1.xpose.msra.mxu0 %v679
    %681 = vmatprep.subr.mxu0 0.0
    %v682 = vand.u32 %v291, 4294901760
    %683 = vmatpush1.xpose.msra.mxu0 %v682
    %684 = vmatprep.subr.mxu0 0.0
    %v685 = vand.u32 %v288, 4294901760
    %686 = vmatpush1.xpose.msra.mxu0 %v685
    %687 = vmatprep.subr.mxu0 0.0
    %v688 = vand.u32 %v285, 4294901760
    %689 = vmatpush1.xpose.msra.mxu0 %v688
    %690 = vmatprep.subr.mxu0 0.0
    %v691 = vand.u32 %v282, 4294901760
    %692 = vmatpush1.xpose.msra.mxu0 %v691
    %693 = vmatprep.subr.mxu0 0.0
    %v694 = vand.u32 %v279, 4294901760
    %695 = vmatpush1.xpose.msra.mxu0 %v694
    %696 = vmatprep.subr.mxu0 0.0
    %v697 = vand.u32 %v276, 4294901760
    %698 = vmatpush1.xpose.msra.mxu0 %v697
    %699 = vmatprep.subr.mxu0 0.0
    %v700 = vand.u32 %v273, 4294901760
    %701 = vmatpush1.xpose.msra.mxu0 %v700
    %702 = vmatprep.subr.mxu0 0.0
    %v703 = vand.u32 %v270, 4294901760
    %704 = vmatpush1.xpose.msra.mxu0 %v703
    %705 = vmatprep.subr.mxu0 0.0
    %v706 = vand.u32 %v267, 4294901760
    %707 = vmatpush1.xpose.msra.mxu0 %v706
    %708 = vmatprep.subr.mxu0 0.0
    %709 = vmatpush2.xpose.msra.mxu0 0.0
    %710 = vmatprep.subr.mxu0 0.0
    %711 = vmatpush2.xpose.msra.mxu0 0.0
    %712 = vmatprep.subr.mxu0 0.0
    %713 = vmatpush2.xpose.msra.mxu0 0.0
    %714 = vmatprep.subr.mxu0 0.0
    %715 = vmatpush2.xpose.msra.mxu0 0.0
    %716 = vmatprep.subr.mxu0 0.0
    %717 = vmatpush2.xpose.msra.mxu0 0.0
    %718 = vmatprep.subr.mxu0 0.0
    %719 = vmatpush2.xpose.msra.mxu0 0.0
    %720 = vmatprep.subr.mxu0 0.0
    %721 = vmatpush2.xpose.msra.mxu0 0.0
    %722 = vmatprep.subr.mxu0 0.0
    %723 = vmatpush2.xpose.msra.mxu0 0.0
    %724 = vmatprep.subr.mxu0 0.0
    %725 = vmatpush2.xpose.msra.mxu0 0.0
    %726 = vmatprep.subr.mxu0 0.0
    %727 = vmatpush2.xpose.msra.mxu0 0.0
    %728 = vmatprep.subr.mxu0 0.0
    %729 = vmatpush2.xpose.msra.mxu0 0.0
    %730 = vmatprep.subr.mxu0 0.0
    %731 = vmatpush2.xpose.msra.mxu0 0.0
    %732 = vmatprep.subr.mxu0 0.0
    %733 = vmatpush2.xpose.msra.mxu0 0.0
    %734 = vmatprep.subr.mxu0 0.0
    %735 = vmatpush2.xpose.msra.mxu0 0.0
    %736 = vmatprep.subr.mxu0 0.0
    %737 = vmatpush2.xpose.msra.mxu0 0.0
    %738 = vmatprep.subr.mxu0 0.0
    %739 = vmatpush2.xpose.msra.mxu0 0.0
    %740 = vmatprep.mubr.f32.mxu0 0.0
    %v741 = vand.u32 %v264, 4294901760
    %v742 = vsub.f32 %v264, %v741
    %v743 = vand.u32 %v742, 4294901760
    %744 = vmatmul.mubr.f32.gmra.mxu0 %v743
    %v745 = vpop.f32.mrf.mxu0
    %v746 = vadd.f32 %v657, %v745
    %v747 = vpop.f32.mrf.mxu0
    %748 = vdwg.mxu0
    %749 = vmatprep.subr.mxu0 0.0
    %v750 = vand.u32 %v312, 4294901760
    %v751 = vsub.f32 %v312, %v750
    %v752 = vand.u32 %v751, 4294901760
    %753 = vmatpush1.xpose.msra.mxu0 %v752
    %754 = vmatprep.subr.mxu0 0.0
    %v755 = vand.u32 %v309, 4294901760
    %v756 = vsub.f32 %v309, %v755
    %v757 = vand.u32 %v756, 4294901760
    %758 = vmatpush1.xpose.msra.mxu0 %v757
    %759 = vmatprep.subr.mxu0 0.0
    %v760 = vand.u32 %v306, 4294901760
    %v761 = vsub.f32 %v306, %v760
    %v762 = vand.u32 %v761, 4294901760
    %763 = vmatpush1.xpose.msra.mxu0 %v762
    %764 = vmatprep.subr.mxu0 0.0
    %v765 = vand.u32 %v303, 4294901760
    %v766 = vsub.f32 %v303, %v765
    %v767 = vand.u32 %v766, 4294901760
    %768 = vmatpush1.xpose.msra.mxu0 %v767
    %769 = vmatprep.subr.mxu0 0.0
    %v770 = vand.u32 %v300, 4294901760
    %v771 = vsub.f32 %v300, %v770
    %v772 = vand.u32 %v771, 4294901760
    %773 = vmatpush1.xpose.msra.mxu0 %v772
    %774 = vmatprep.subr.mxu0 0.0
    %v775 = vand.u32 %v297, 4294901760
    %v776 = vsub.f32 %v297, %v775
    %v777 = vand.u32 %v776, 4294901760
    %778 = vmatpush1.xpose.msra.mxu0 %v777
    %779 = vmatprep.subr.mxu0 0.0
    %v780 = vand.u32 %v294, 4294901760
    %v781 = vsub.f32 %v294, %v780
    %v782 = vand.u32 %v781, 4294901760
    %783 = vmatpush1.xpose.msra.mxu0 %v782
    %784 = vmatprep.subr.mxu0 0.0
    %v785 = vand.u32 %v291, 4294901760
    %v786 = vsub.f32 %v291, %v785
    %v787 = vand.u32 %v786, 4294901760
    %788 = vmatpush1.xpose.msra.mxu0 %v787
    %789 = vmatprep.subr.mxu0 0.0
    %v790 = vand.u32 %v288, 4294901760
    %v791 = vsub.f32 %v288, %v790
    %v792 = vand.u32 %v791, 4294901760
    %793 = vmatpush1.xpose.msra.mxu0 %v792
    %794 = vmatprep.subr.mxu0 0.0
    %v795 = vand.u32 %v285, 4294901760
    %v796 = vsub.f32 %v285, %v795
    %v797 = vand.u32 %v796, 4294901760
    %798 = vmatpush1.xpose.msra.mxu0 %v797
    %799 = vmatprep.subr.mxu0 0.0
    %v800 = vand.u32 %v282, 4294901760
    %v801 = vsub.f32 %v282, %v800
    %v802 = vand.u32 %v801, 4294901760
    %803 = vmatpush1.xpose.msra.mxu0 %v802
    %804 = vmatprep.subr.mxu0 0.0
    %v805 = vand.u32 %v279, 4294901760
    %v806 = vsub.f32 %v279, %v805
    %v807 = vand.u32 %v806, 4294901760
    %808 = vmatpush1.xpose.msra.mxu0 %v807
    %809 = vmatprep.subr.mxu0 0.0
    %v810 = vand.u32 %v276, 4294901760
    %v811 = vsub.f32 %v276, %v810
    %v812 = vand.u32 %v811, 4294901760
    %813 = vmatpush1.xpose.msra.mxu0 %v812
    %814 = vmatprep.subr.mxu0 0.0
    %v815 = vand.u32 %v273, 4294901760
    %v816 = vsub.f32 %v273, %v815
    %v817 = vand.u32 %v816, 4294901760
    %818 = vmatpush1.xpose.msra.mxu0 %v817
    %819 = vmatprep.subr.mxu0 0.0
    %v820 = vand.u32 %v270, 4294901760
    %v821 = vsub.f32 %v270, %v820
    %v822 = vand.u32 %v821, 4294901760
    %823 = vmatpush1.xpose.msra.mxu0 %v822
    %824 = vmatprep.subr.mxu0 0.0
    %v825 = vand.u32 %v267, 4294901760
    %v826 = vsub.f32 %v267, %v825
    %v827 = vand.u32 %v826, 4294901760
    %828 = vmatpush1.xpose.msra.mxu0 %v827
    %829 = vmatprep.subr.mxu0 0.0
    %830 = vmatpush2.xpose.msra.mxu0 0.0
    %831 = vmatprep.subr.mxu0 0.0
    %832 = vmatpush2.xpose.msra.mxu0 0.0
    %833 = vmatprep.subr.mxu0 0.0
    %834 = vmatpush2.xpose.msra.mxu0 0.0
    %835 = vmatprep.subr.mxu0 0.0
    %836 = vmatpush2.xpose.msra.mxu0 0.0
    %837 = vmatprep.subr.mxu0 0.0
    %838 = vmatpush2.xpose.msra.mxu0 0.0
    %839 = vmatprep.subr.mxu0 0.0
    %840 = vmatpush2.xpose.msra.mxu0 0.0
    %841 = vmatprep.subr.mxu0 0.0
    %842 = vmatpush2.xpose.msra.mxu0 0.0
    %843 = vmatprep.subr.mxu0 0.0
    %844 = vmatpush2.xpose.msra.mxu0 0.0
    %845 = vmatprep.subr.mxu0 0.0
    %846 = vmatpush2.xpose.msra.mxu0 0.0
    %847 = vmatprep.subr.mxu0 0.0
    %848 = vmatpush2.xpose.msra.mxu0 0.0
    %849 = vmatprep.subr.mxu0 0.0
    %850 = vmatpush2.xpose.msra.mxu0 0.0
    %851 = vmatprep.subr.mxu0 0.0
    %852 = vmatpush2.xpose.msra.mxu0 0.0
    %853 = vmatprep.subr.mxu0 0.0
    %854 = vmatpush2.xpose.msra.mxu0 0.0
    %855 = vmatprep.subr.mxu0 0.0
    %856 = vmatpush2.xpose.msra.mxu0 0.0
    %857 = vmatprep.subr.mxu0 0.0
    %858 = vmatpush2.xpose.msra.mxu0 0.0
    %859 = vmatprep.subr.mxu0 0.0
    %860 = vmatpush2.xpose.msra.mxu0 0.0
    %861 = vmatprep.mubr.f32.mxu0 0.0
    %v862 = vand.u32 %v264, 4294901760
    %863 = vmatmul.mubr.f32.gmra.mxu0 %v862
    %v864 = vpop.f32.mrf.mxu0
    %v865 = vadd.f32 %v746, %v864
    %v866 = vpop.f32.mrf.mxu0
    %867 = vdwg.mxu0
    %868 = vmatprep.subr.mxu0 0.0
    %v869 = vand.u32 %v312, 4294901760
    %870 = vmatpush1.xpose.msra.mxu0 %v869
    %871 = vmatprep.subr.mxu0 0.0
    %v872 = vand.u32 %v309, 4294901760
    %873 = vmatpush1.xpose.msra.mxu0 %v872
    %874 = vmatprep.subr.mxu0 0.0
    %v875 = vand.u32 %v306, 4294901760
    %876 = vmatpush1.xpose.msra.mxu0 %v875
    %877 = vmatprep.subr.mxu0 0.0
    %v878 = vand.u32 %v303, 4294901760
    %879 = vmatpush1.xpose.msra.mxu0 %v878
    %880 = vmatprep.subr.mxu0 0.0
    %v881 = vand.u32 %v300, 4294901760
    %882 = vmatpush1.xpose.msra.mxu0 %v881
    %883 = vmatprep.subr.mxu0 0.0
    %v884 = vand.u32 %v297, 4294901760
    %885 = vmatpush1.xpose.msra.mxu0 %v884
    %886 = vmatprep.subr.mxu0 0.0
    %v887 = vand.u32 %v294, 4294901760
    %888 = vmatpush1.xpose.msra.mxu0 %v887
    %889 = vmatprep.subr.mxu0 0.0
    %v890 = vand.u32 %v291, 4294901760
    %891 = vmatpush1.xpose.msra.mxu0 %v890
    %892 = vmatprep.subr.mxu0 0.0
    %v893 = vand.u32 %v288, 4294901760
    %894 = vmatpush1.xpose.msra.mxu0 %v893
    %895 = vmatprep.subr.mxu0 0.0
    %v896 = vand.u32 %v285, 4294901760
    %897 = vmatpush1.xpose.msra.mxu0 %v896
    %898 = vmatprep.subr.mxu0 0.0
    %v899 = vand.u32 %v282, 4294901760
    %900 = vmatpush1.xpose.msra.mxu0 %v899
    %901 = vmatprep.subr.mxu0 0.0
    %v902 = vand.u32 %v279, 4294901760
    %903 = vmatpush1.xpose.msra.mxu0 %v902
    %904 = vmatprep.subr.mxu0 0.0
    %v905 = vand.u32 %v276, 4294901760
    %906 = vmatpush1.xpose.msra.mxu0 %v905
    %907 = vmatprep.subr.mxu0 0.0
    %v908 = vand.u32 %v273, 4294901760
    %909 = vmatpush1.xpose.msra.mxu0 %v908
    %910 = vmatprep.subr.mxu0 0.0
    %v911 = vand.u32 %v270, 4294901760
    %912 = vmatpush1.xpose.msra.mxu0 %v911
    %913 = vmatprep.subr.mxu0 0.0
    %v914 = vand.u32 %v267, 4294901760
    %915 = vmatpush1.xpose.msra.mxu0 %v914
    %916 = vmatprep.subr.mxu0 0.0
    %917 = vmatpush2.xpose.msra.mxu0 0.0
    %918 = vmatprep.subr.mxu0 0.0
    %919 = vmatpush2.xpose.msra.mxu0 0.0
    %920 = vmatprep.subr.mxu0 0.0
    %921 = vmatpush2.xpose.msra.mxu0 0.0
    %922 = vmatprep.subr.mxu0 0.0
    %923 = vmatpush2.xpose.msra.mxu0 0.0
    %924 = vmatprep.subr.mxu0 0.0
    %925 = vmatpush2.xpose.msra.mxu0 0.0
    %926 = vmatprep.subr.mxu0 0.0
    %927 = vmatpush2.xpose.msra.mxu0 0.0
    %928 = vmatprep.subr.mxu0 0.0
    %929 = vmatpush2.xpose.msra.mxu0 0.0
    %930 = vmatprep.subr.mxu0 0.0
    %931 = vmatpush2.xpose.msra.mxu0 0.0
    %932 = vmatprep.subr.mxu0 0.0
    %933 = vmatpush2.xpose.msra.mxu0 0.0
    %934 = vmatprep.subr.mxu0 0.0
    %935 = vmatpush2.xpose.msra.mxu0 0.0
    %936 = vmatprep.subr.mxu0 0.0
    %937 = vmatpush2.xpose.msra.mxu0 0.0
    %938 = vmatprep.subr.mxu0 0.0
    %939 = vmatpush2.xpose.msra.mxu0 0.0
    %940 = vmatprep.subr.mxu0 0.0
    %941 = vmatpush2.xpose.msra.mxu0 0.0
    %942 = vmatprep.subr.mxu0 0.0
    %943 = vmatpush2.xpose.msra.mxu0 0.0
    %944 = vmatprep.subr.mxu0 0.0
    %945 = vmatpush2.xpose.msra.mxu0 0.0
    %946 = vmatprep.subr.mxu0 0.0
    %947 = vmatpush2.xpose.msra.mxu0 0.0
    %948 = vmatprep.mubr.f32.mxu0 0.0
    %v949 = vand.u32 %v264, 4294901760
    %950 = vmatmul.mubr.f32.gmra.mxu0 %v949
    %v951 = vpop.f32.mrf.mxu0
    %v952 = vadd.f32 %v865, %v951
    %v953 = vpop.f32.mrf.mxu0
    %954 = vdwg.mxu0
    %955 = vst [vmem:[#allocation3] sm:$0x1] %v952
    // Predicated region
    $region22: #{tpu_custom_call.1} parent=1 // pred_check
      _
    $region23: #{tpu_custom_call.1} parent=1 // pred_check_branch
      %957 = sbr.rel (0) target = $region25
    $region24: #{tpu_custom_call.1} parent=1 // pred_region
      %s959 = ssub.s32 16, 16
      %960 = vsyncadd [#allocation4], %s959
      %s962 = sshll.u32 [#allocation3], 4
      %s963 = int_to_ptr.vmem [resolvable:$true] %s962
      %965 = dma.vmem_to_hbm [thread:$0]  %s963, 16, %s5, [#allocation4]
    $region25: #{tpu_custom_call.1} parent=1 // pred_fallthru
      _
    // Predicated region
    $region26: #{tpu_custom_call.1} parent=1 // pred_check
      _
    $region27: #{tpu_custom_call.1} parent=1 // pred_check_branch
      %967 = sbr.rel (0) target = $region29
    $region28: #{tpu_custom_call.1} parent=1 // pred_region
      %968 = dma.done [#allocation4], 16
    $region29: #{tpu_custom_call.1} parent=1 // pred_fallthru
      _
    %969 = vsyncpa [#allocation4], 1

</llo_original>
